<compile_context>
chip_gen: v6e
topology: v6e:2x2x1
jax: 0.10.0
libtpu: 0.0.40
codegen_flags: <defaults>
</compile_context>

<pallas_src>
import functools

import jax
import jax.numpy as jnp
from jax.experimental import pallas as pl
from jax.experimental.pallas import tpu as pltpu


# ----------------------------- kernels ------------------------------------- #

def _gap_masked_kernel(x_ref, m_ref, inv_ref, o_ref, acc_ref):
    # x:(TB,TS,D)  m:(TB,1,TS)  inv:(TB,1)f32  o:(TB,D)  acc:(TB,1,D)f32
    k = pl.program_id(1)

    @pl.when(k == 0)
    def _():
        acc_ref[...] = jnp.zeros_like(acc_ref)

    # (TB,1,TS) @ (TB,TS,D) -> (TB,1,D): batched MXU matmul with f32
    # accumulation; x and mask stay in their native dtype (no VPU upcast pass).
    # The accumulator has the same (TB,1,D) layout, so this is a plain add.
    acc_ref[...] += jnp.einsum(
        "bis,bsd->bid", m_ref[...], x_ref[...],
        preferred_element_type=jnp.float32)

    @pl.when(k == pl.num_programs(1) - 1)
    def _():
        # Single sublane squeeze + single 1/sum(mask) scale, at finalize only.
        o_ref[...] = (acc_ref[...][:, 0, :] * inv_ref[...]).astype(o_ref.dtype)


def _gap_mean_kernel(x_ref, o_ref, acc_ref, *, inv_s):
    # Unmasked path: plain sum over the seq tile, scaled by the constant 1/S.
    # No mask array is ever materialized or DMA'd.
    k = pl.program_id(1)

    @pl.when(k == 0)
    def _():
        acc_ref[...] = jnp.zeros_like(acc_ref)

    acc_ref[...] += jnp.sum(x_ref[...], axis=1, dtype=jnp.float32)

    @pl.when(k == pl.num_programs(1) - 1)
    def _():
        o_ref[...] = (acc_ref[...] * inv_s).astype(o_ref.dtype)


# ----------------------------- tiling helpers ------------------------------ #

def _round_up(n, m):
    return -(-n // m) * m


def _vmem_capacity_bytes():
    try:
        return int(pltpu.get_tpu_info().vmem_capacity_bytes)
    except Exception:
        return 64 * 1024 * 1024  # conservative default (v7x per-TensorCore)


def _pick_tiles(B, S, D, itemsize, budget, seq_align):
    """Pick (TB, Bp, TS, Sp) with TB | Bp and TS | Sp (Bp/Sp = padded dims).

    Legality: x block (TB,TS,D) needs TS%8==0 or TS==Sp; mask block (TB,1,TS)
    needs TS%128==0 or TS==Sp; out block (TB,D) needs TB%8==0 or TB==Bp.
    The budget bounds TB*TS*D*itemsize (advisory: floor is one aligned tile),
    so the picked block can never silently blow past VMEM.
    """
    row_bytes = max(D * itemsize, 1)

    # Batch tile: 8 is already sublane-dense for the (TB, D) output store, and a
    # small TB keeps the "parallel" batch axis long for v7x megacore sharding.
    if B <= 8:
        TB, Bp = B, B                      # TB == full dim -> always legal
    else:
        Bp = _round_up(B, 8)
        TB = 8

    ts_cap = max(1, budget // (TB * row_bytes))
    if S <= ts_cap:
        TS, Sp = S, S                      # whole sequence per step (always legal)
        if B > 8:
            # Whole seq fits: grow TB within budget to cut grid-step overhead,
            # but keep >= 2 batch steps so both v7x TensorCores get work.
            tb = min(budget // max(S * row_bytes, 1), Bp // 2)
            tb = max(8, (tb // 8) * 8)
            while Bp % tb:
                tb -= 8
            TB = tb
    else:
        TS = max(seq_align, (ts_cap // seq_align) * seq_align)
        Sp = _round_up(S, TS)
    return TB, Bp, TS, Sp


# ----------------------------- wrapper -------------------------------------- #

def global_avg_pooling_1d(x, attention_mask=None, *, x_tile_budget_bytes=None):
    """x: (B, S, D); attention_mask: optional (B, S). Returns (B, D)."""
    B, S, D = x.shape
    itemsize = jnp.dtype(x.dtype).itemsize
    masked = attention_mask is not None

    vmem_cap = _vmem_capacity_bytes()
    if x_tile_budget_bytes is None:
        # ~1/5 of physical VMEM: ~25 MiB on v5e/v6e (128 MiB), ~12 MiB on v7x
        # (64 MiB/TC) -- leaves room for the double-buffered pipeline
        # (2x x-tile + mask + out) plus the f32 accumulator.
        x_tile_budget_bytes = max(vmem_cap // 5, 1 << 20)

    seq_align = 128 if masked else 8  # mask block (TB,1,TS) needs lane-dense TS
    TB, Bp, TS, Sp = _pick_tiles(B, S, D, itemsize, x_tile_budget_bytes, seq_align)
    grid = (Bp // TB, Sp // TS)

    # Zero-pad to the tile grid (zeros are sum-neutral; padded batch rows are
    # sliced off below).  No-op for nicely-shaped inputs.
    if Bp != B or Sp != S:
        x = jnp.pad(x, ((0, Bp - B), (0, Sp - S), (0, 0)))

    # VMEM accounting with (8,128) layout padding; pipeline inputs/outputs are
    # double-buffered.  Clamp under physical VMEM with headroom for internal
    # scratch (-> <=120 MiB on v5e/v6e, <=56 MiB on v7x).
    r8 = lambda n: _round_up(n, 8)        # noqa: E731
    r128 = lambda n: _round_up(n, 128)    # noqa: E731
    x_tile_b = TB * r8(TS) * r128(D) * itemsize
    out_tile_b = r8(TB) * r128(D) * itemsize
    if masked:
        m_tile_b = TB * 8 * r128(TS) * itemsize      # (TB,1,TS): sublane 1->8
        inv_tile_b = r8(TB) * 128 * 4                # (TB,1): lanes 1->128
        acc_b = TB * 8 * r128(D) * 4                 # (TB,1,D) f32 scratch
    else:
        m_tile_b = inv_tile_b = 0
        acc_b = r8(TB) * r128(D) * 4                 # (TB,D) f32 scratch
    io_b = 2 * (x_tile_b + m_tile_b + inv_tile_b + out_tile_b) + acc_b
    vmem_limit = int(min(max(io_b + (4 << 20), 32 << 20), vmem_cap - (8 << 20)))

    compiler_params = pltpu.CompilerParams(
        dimension_semantics=("parallel", "arbitrary"),
        vmem_limit_bytes=vmem_limit,
    )
    out_shape = jax.ShapeDtypeStruct((Bp, D), x.dtype)
    out_spec = pl.BlockSpec((TB, D), lambda b, k: (b, 0))      # resident over k
    x_spec = pl.BlockSpec((TB, TS, D), lambda b, k: (b, k, 0))

    if not masked:
        out = pl.pallas_call(
            functools.partial(_gap_mean_kernel, inv_s=1.0 / S),
            out_shape=out_shape,
            grid_spec=pltpu.PrefetchScalarGridSpec(
                num_scalar_prefetch=0,
                grid=grid,
                in_specs=[x_spec],
                out_specs=out_spec,
                scratch_shapes=[pltpu.VMEM((TB, D), jnp.float32)],
            ),
            compiler_params=compiler_params,
        )(x)
        return out[:B] if Bp != B else out

    # Masked path.  Match torch exactly: cast the mask to x.dtype *before* both
    # the numerator (in-kernel matmul) and the denominator (computed here).
    mask_x = attention_mask.astype(x.dtype)
    den = jnp.sum(mask_x.astype(jnp.float32), axis=1, keepdims=True)   # (B, 1)
    inv_den = 1.0 / den        # all-zero row -> inf; 0 * inf = NaN (torch 0/0)
    mask3 = mask_x.reshape(B, 1, S)
    if Bp != B or Sp != S:
        mask3 = jnp.pad(mask3, ((0, Bp - B), (0, 0), (0, Sp - S)))
        inv_den = jnp.pad(inv_den, ((0, Bp - B), (0, 0)))

    out = pl.pallas_call(
        _gap_masked_kernel,
        out_shape=out_shape,
        grid_spec=pltpu.PrefetchScalarGridSpec(
            num_scalar_prefetch=0,
            grid=grid,
            in_specs=[
                x_spec,
                pl.BlockSpec((TB, 1, TS), lambda b, k: (b, 0, k)),
                pl.BlockSpec((TB, 1), lambda b, k: (b, 0)),
            ],
            out_specs=out_spec,
            scratch_shapes=[pltpu.VMEM((TB, 1, D), jnp.float32)],
        ),
        compiler_params=compiler_params,
    )(x, mask3, inv_den)
    return out[:B] if Bp != B else out


# ----------------------------- test ----------------------------------------- #

if __name__ == "__main__":
    keys = jax.random.split(jax.random.PRNGKey(0), 6)

    def ref_nomask(x):
        return jnp.mean(x.astype(jnp.float32), axis=1).astype(x.dtype)

    def ref_mask(x, m):
        mx = m.astype(x.dtype)[..., None].astype(jnp.float32)
        xf = x.astype(jnp.float32)
        return (jnp.sum(xf * mx, axis=1) / jnp.sum(mx, axis=1)).astype(x.dtype)

    # Case 1: tiny docstring-like shapes (single grid step, full-dim blocks).
    B, S, D = 2, 8, 32
    x = jax.random.normal(keys[0], (B, S, D), dtype=jnp.float32)
    m = (jax.random.uniform(keys[1], (B, S)) > 0.3).astype(jnp.float32)
    m = m.at[:, 0].set(1.0)  # >= 1 valid token per row
    o = jax.block_until_ready(global_avg_pooling_1d(x))
    assert o.shape == (B, D)
    assert jnp.allclose(o, ref_nomask(x), atol=1e-5, rtol=1e-5)
    o = jax.block_until_ready(global_avg_pooling_1d(x, m))
    assert jnp.allclose(o, ref_mask(x, m), atol=1e-5, rtol=1e-5)

    # Case 2: non-divisible S + tiny tile budget -> multi-step seq reduction
    # (exercises the accumulator) plus wrapper-side seq padding.
    B, S, D = 8, 300, 128
    x = jax.random.normal(keys[2], (B, S, D), dtype=jnp.float32)
    m = (jax.random.uniform(keys[3], (B, S)) > 0.5).astype(jnp.float32)
    m = m.at[:, 0].set(1.0)
    o = jax.block_until_ready(global_avg_pooling_1d(x, x_tile_budget_bytes=64 * 1024))
    assert jnp.allclose(o, ref_nomask(x), atol=1e-4, rtol=1e-4)
    o = jax.block_until_ready(global_avg_pooling_1d(x, m, x_tile_budget_bytes=64 * 1024))
    assert jnp.allclose(o, ref_mask(x, m), atol=1e-4, rtol=1e-4)

    # Case 3: batch not a multiple of 8 -> wrapper batch padding + 2 batch steps.
    B, S, D = 9, 40, 64
    x = jax.random.normal(keys[4], (B, S, D), dtype=jnp.float32)
    m = (jax.random.uniform(keys[5], (B, S)) > 0.4).astype(jnp.float32)
    m = m.at[:, 0].set(1.0)
    o = jax.block_until_ready(global_avg_pooling_1d(x))
    assert o.shape == (B, D)
    assert jnp.allclose(o, ref_nomask(x), atol=1e-5, rtol=1e-5)
    o = jax.block_until_ready(global_avg_pooling_1d(x, m))
    assert jnp.allclose(o, ref_mask(x, m), atol=1e-5, rtol=1e-5)

    # Case 4: bf16 inputs (native-dtype MXU inputs, f32 accumulation).
    xb = x.astype(jnp.bfloat16)
    o = jax.block_until_ready(global_avg_pooling_1d(xb, m))
    assert o.dtype == jnp.bfloat16
    assert jnp.allclose(o.astype(jnp.float32),
                        ref_mask(xb, m).astype(jnp.float32),
                        atol=1e-2, rtol=2e-2)

    print("KERNEL_OK")
</pallas_src>

<mosaic_0001>
module attributes {stable_mosaic.version = 11 : i64} {
  func.func @_gap_mean_kernel(%arg0: i32, %arg1: i32, %arg2: memref<2x8x32xf32, #tpu.memory_space<vmem>>, %arg3: memref<2x32xf32, #tpu.memory_space<vmem>>, %arg4: memref<2x32xf32, #tpu.memory_space<vmem>>) attributes {dimension_semantics = [#tpu.dimension_semantics<parallel>, #tpu.dimension_semantics<arbitrary>], iteration_bounds = array<i64: 1, 1>, scalar_prefetch = 0 : i64, scratch_operands = 1 : i64, tpu.core_type = #tpu.core_type<tc>, window_params = [{transform_indices = @transform_0, window_bounds = array<i64: 2, 8, 32>}, {transform_indices = @transform_1, window_bounds = array<i64: 2, 32>}]} {
    %c0_i32 = arith.constant 0 : i32
    %0 = arith.cmpi eq, %arg1, %c0_i32 : i32
    %1 = arith.extui %0 : i1 to i32
    %c0_i32_0 = arith.constant 0 : i32
    %2 = arith.cmpi ne, %1, %c0_i32_0 : i32
    scf.if %2 {
      %cst_9 = arith.constant 0.000000e+00 : f32
      %11 = vector.broadcast %cst_9 : f32 to vector<2x32xf32>
      %c0_10 = arith.constant 0 : index
      %c0_11 = arith.constant 0 : index
      %12 = vector.load %arg4[%c0_10, %c0_11] : memref<2x32xf32, #tpu.memory_space<vmem>>, vector<2x32xf32>
      tpu.vector_store %arg4[%c0_10, %c0_11], %11 {strides = array<i32>} : memref<2x32xf32, #tpu.memory_space<vmem>>, vector<2x32xf32>,
    } else {
    }
    %c0 = arith.constant 0 : index
    %c0_1 = arith.constant 0 : index
    %3 = vector.load %arg4[%c0, %c0_1] : memref<2x32xf32, #tpu.memory_space<vmem>>, vector<2x32xf32>
    %c0_2 = arith.constant 0 : index
    %c0_3 = arith.constant 0 : index
    %c0_4 = arith.constant 0 : index
    %4 = vector.load %arg2[%c0_2, %c0_3, %c0_4] : memref<2x8x32xf32, #tpu.memory_space<vmem>>, vector<2x8x32xf32>
    %cst = arith.constant dense<0.000000e+00> : vector<2x32xf32>
    %5 = vector.multi_reduction <add>, %4, %cst [1] : vector<2x8x32xf32> to vector<2x32xf32>
    %6 = arith.addf %3, %5 : vector<2x32xf32>
    %c0_5 = arith.constant 0 : index
    %c0_6 = arith.constant 0 : index
    %7 = vector.load %arg4[%c0_5, %c0_6] : memref<2x32xf32, #tpu.memory_space<vmem>>, vector<2x32xf32>
    tpu.vector_store %arg4[%c0_5, %c0_6], %6 {strides = array<i32>} : memref<2x32xf32, #tpu.memory_space<vmem>>, vector<2x32xf32>,
    %c0_i32_7 = arith.constant 0 : i32
    %8 = arith.cmpi eq, %arg1, %c0_i32_7 : i32
    %9 = arith.extui %8 : i1 to i32
    %c0_i32_8 = arith.constant 0 : i32
    %10 = arith.cmpi ne, %9, %c0_i32_8 : i32
    scf.if %10 {
      %c0_9 = arith.constant 0 : index
      %c0_10 = arith.constant 0 : index
      %11 = vector.load %arg4[%c0_9, %c0_10] : memref<2x32xf32, #tpu.memory_space<vmem>>, vector<2x32xf32>
      %cst_11 = arith.constant 1.250000e-01 : f32
      %12 = vector.broadcast %cst_11 : f32 to vector<2x32xf32>
      %13 = arith.mulf %11, %12 : vector<2x32xf32>
      %c0_12 = arith.constant 0 : index
      %c0_13 = arith.constant 0 : index
      %14 = vector.load %arg3[%c0_12, %c0_13] : memref<2x32xf32, #tpu.memory_space<vmem>>, vector<2x32xf32>
      tpu.vector_store %arg3[%c0_12, %c0_13], %13 {strides = array<i32>} : memref<2x32xf32, #tpu.memory_space<vmem>>, vector<2x32xf32>,
    } else {
    }
    return
  }
  func.func @transform_0(%arg0: i32, %arg1: i32) -> (i32, i32, i32) {
    %c0_i32 = arith.constant 0 : i32
    %c0_i32_0 = arith.constant 0 : i32
    return %arg0, %arg1, %c0_i32 : i32, i32, i32
  }
  func.func @transform_1(%arg0: i32, %arg1: i32) -> (i32, i32) {
    %c0_i32 = arith.constant 0 : i32
    %c0_i32_0 = arith.constant 0 : i32
    return %arg0, %c0_i32 : i32, i32
  }
}

</mosaic_0001>

<llo_original>
// kernel: tpu_custom_call.1
$region0: #{tpu_custom_call.1}
  #allocation0 [shape = 'u32[]', space=smem, size = 0x4, offset = 0x4, fixed_abs, tag = 'smem constant byte address 0x4 - core index']
  #allocation1 [shape = 'u32[144,128]{1,0:T(1,128)}', space=vmem, size = 0x12000, scoped, tag = 'internal scratch']
  #allocation2 [shape = 'f32[2,32]{1,0:T(2,128)}', space=vmem, size = 0x400, scoped, tag = 'scratch operand']
  %s0 = inlined_call_operand.hbm [shape: f32[2,8,32], index: 0, kind: input, shape index: {}]
  %s1 = inlined_call_operand.hbm [shape: f32[2,32], index: 1, kind: output, shape index: {}]
  %s2 = sld [smem:[#allocation0]]
  $region26: #{tpu_custom_call.1} parent=0
    _
  %s4 = ssub.s32 1, %s2
  %s5 = scalar_select 0, %s4, %s2
  $region1: #{tpu_custom_call.1} parent=0
    #allocation3 [shape = 'u8[8192]{0}', space=vmem, size = 0x2000, scoped, tag = 'input window, operand 0, single buffered']
    #allocation4 [shape = 's32[1]{0}', space=sflag, size = 0x4, scoped, tag = 'scoped memory for tpu_custom_call.1']
    #allocation5 [shape = 's32[1]{0}', space=sflag, size = 0x4, scoped, tag = 'scoped memory for tpu_custom_call.1']
    #allocation6 [shape = 'u8[1024]{0}', space=vmem, size = 0x400, scoped, tag = 'output window, operand 0, single buffered']
    %6 = vsyncpa [#allocation4], 0
    %7 = vsyncpa [#allocation5], 0
    // Predicated region
    $region2: #{tpu_custom_call.1} parent=1 // pred_check
      _
    $region3: #{tpu_custom_call.1} parent=1 // pred_check_branch
      %9 = sbr.rel (0) target = $region5
    $region4: #{tpu_custom_call.1} parent=1 // pred_region
      %s11 = ssub.s32 256, 256
      %12 = vsyncadd [#allocation4], %s11
      %s13 = sshll.u32 [#allocation3], 4
      %s14 = int_to_ptr.vmem [resolvable:$true] %s13
      %19 = dma.hbm_to_vmem [thread:$0]  %s0, 256, %s14, [#allocation4], 128, 128, 8
    $region5: #{tpu_custom_call.1} parent=1 // pred_fallthru
      _
    // Predicated region
    $region6: #{tpu_custom_call.1} parent=1 // pred_check
      _
    $region7: #{tpu_custom_call.1} parent=1 // pred_check_branch
      %21 = sbr.rel (0) target = $region9
    $region8: #{tpu_custom_call.1} parent=1 // pred_region
      %22 = dma.done [#allocation4], 256
    $region9: #{tpu_custom_call.1} parent=1 // pred_fallthru
      _
    %p23 = scmp.eq.s32.totalorder 0, 0
    // Predicated region
    $region10: #{tpu_custom_call.1} parent=1 // pred_check
      %p24 = pneg %p23
    $region11: #{tpu_custom_call.1} parent=1 // pred_check_branch
      %26 = sbr.rel (%p24) target = $region13
    $region12: #{tpu_custom_call.1} parent=1 // pred_region
      %vm27 = vcmask 254976
      %28 = vst.msk [vmem:[#allocation2] sm:$0x3] %vm27, 0.0
    $region13: #{tpu_custom_call.1} parent=1 // pred_fallthru
      _
    %v29 = vld [vmem:[#allocation2] sm:$0x3]
    %v30 = vld [vmem:[#allocation3] sm:$0xff]
    %v31 = vld [vmem:[#allocation3 + $0x8] sm:$0xff]
    %vm32 = vcmask 261120
    %v33 = vsel %vm32, %v30, 0.0
    %v34 = vrot.slane %v33, 4
    %v35 = vadd.f32 %v33, %v34
    %v36 = vrot.slane %v35, 2
    %v37 = vadd.f32 %v35, %v36
    %v38 = vrot.slane %v37, 1
    %v39 = vadd.f32 %v37, %v38
    %v40 = vsel %vm32, %v31, 0.0
    %v41 = vrot.slane %v40, 4
    %v42 = vadd.f32 %v40, %v41
    %v43 = vrot.slane %v42, 2
    %v44 = vadd.f32 %v42, %v43
    %v45 = vrot.slane %v44, 1
    %v46 = vadd.f32 %v44, %v45
    %vm49 = vcmask 1041409
    %v50 = vsel %vm49, %v46, %v39
    %v52 = vadd.f32 %v29, %v50
    %vm53 = vcmask 254976
    %54 = vst.msk [vmem:[#allocation2] sm:$0x3] %vm53, %v52
    // Predicated region
    $region14: #{tpu_custom_call.1} parent=1 // pred_check
      %p55 = pneg %p23
    $region15: #{tpu_custom_call.1} parent=1 // pred_check_branch
      %57 = sbr.rel (%p55) target = $region17
    $region16: #{tpu_custom_call.1} parent=1 // pred_region
      %v58 = vld [vmem:[#allocation2] sm:$0x3]
      %v59 = vmul.f32 %v58, 0.125
      %60 = vst.msk [vmem:[#allocation6] sm:$0x3] %vm53, %v59
    $region17: #{tpu_custom_call.1} parent=1 // pred_fallthru
      _
    // Predicated region
    $region18: #{tpu_custom_call.1} parent=1 // pred_check
      _
    $region19: #{tpu_custom_call.1} parent=1 // pred_check_branch
      %62 = sbr.rel (0) target = $region21
    $region20: #{tpu_custom_call.1} parent=1 // pred_region
      %s64 = ssub.s32 32, 32
      %65 = vsyncadd [#allocation5], %s64
      %s67 = sshll.u32 [#allocation6], 4
      %s68 = int_to_ptr.vmem [resolvable:$true] %s67
      %70 = dma.vmem_to_hbm [thread:$0]  %s68, 32, %s1, [#allocation5]
    $region21: #{tpu_custom_call.1} parent=1 // pred_fallthru
      _
    // Predicated region
    $region22: #{tpu_custom_call.1} parent=1 // pred_check
      _
    $region23: #{tpu_custom_call.1} parent=1 // pred_check_branch
      %72 = sbr.rel (0) target = $region25
    $region24: #{tpu_custom_call.1} parent=1 // pred_region
      %73 = dma.done [#allocation5], 32
    $region25: #{tpu_custom_call.1} parent=1 // pred_fallthru
      _
    %74 = vsyncpa [#allocation4], 1
    %75 = vsyncpa [#allocation5], 1

</llo_original>
